<compile_context>
chip_gen: v6e
topology: v6e:2x2x1
jax: 0.10.0
libtpu: 0.0.40
codegen_flags: <defaults>
</compile_context>

<pallas_src>
import functools

import jax
import jax.numpy as jnp
from jax import lax
from jax.experimental import pallas as pl
from jax.experimental.pallas import tpu as pltpu


def _round_up(v, m):
    return ((v + m - 1) // m) * m


def _sublane_multiple(dtype) -> int:
    itemsize = jnp.dtype(dtype).itemsize
    return {4: 8, 2: 16, 1: 32}.get(itemsize, 8)


def _pick_tile(dim: int, cap: int, align: int) -> int:
    """Pick a tile size (multiple of `align`, <= cap) for a dimension.

    Minimises the number of grid steps first, then total padding, then prefers
    the largest tile.  All trace-time Python, tiny loop (<= cap/align iters).
    """
    d = _round_up(dim, align)
    if d <= cap:
        return d
    best_t, best_key = align, None
    t = align
    while t <= cap:
        steps = -(-d // t)                      # ceil(d / t)
        key = (steps, steps * t, -t)
        if best_key is None or key < best_key:
            best_key, best_t = key, t
        t += align
    return best_t


def _lora_linear_kernel(x_ref, wt_ref, u_ref, bt_ref, bias_ref, out_ref,
                        acc_ref):
    """One grid step (i, j, k):
         acc += x_tile @ Wt_tile          (base matmul, contract K; no transpose)
       at the last k step:
         out  = acc + u_tile @ Bt_tile + bias
    """
    k = pl.program_id(2)

    @pl.when(k == 0)
    def _():
        acc_ref[...] = jnp.zeros_like(acc_ref)

    # Base linear: x [tm, tk] @ Wt [tk, tn] -> f32 accumulator.
    acc_ref[...] += lax.dot_general(
        x_ref[...], wt_ref[...],
        dimension_numbers=(((1,), (0,)), ((), ())),
        preferred_element_type=jnp.float32,
    )

    @pl.when(k == pl.num_programs(2) - 1)
    def _():
        # LoRA epilogue: u [tm, rp] @ Bt [rp, tn], once per (i, j) tile.
        u = u_ref[...]
        b = bt_ref[...]
        if b.dtype == jnp.bfloat16:
            # Single-pass bf16 MXU matmul; accumulation stays f32.
            u = u.astype(jnp.bfloat16)
        else:
            b = b.astype(jnp.float32)
        lora = lax.dot_general(
            u, b,
            dimension_numbers=(((1,), (0,)), ((), ())),
            preferred_element_type=jnp.float32,
        )
        out_ref[...] = (acc_ref[...] + lora + bias_ref[...]).astype(out_ref.dtype)


@functools.partial(jax.jit, static_argnames=("tm", "tn", "tk"))
def column_parallel_linear_with_lora(x, weight, lora_A, lora_B, bias,
                                     *, tm=None, tn=None, tk=None):
    """Pallas implementation of ColumnParallelLinearWithLoRA.forward (TP=1).

    x:       [M, K]  activations
    weight:  [N, K]  base weight (out_features, in_features)
    lora_A:  [r, K]
    lora_B:  [N, r]
    bias:    [N]
    returns: (output [M, N], output_bias=None)
    """
    M, K = x.shape
    N, _ = weight.shape
    r = lora_A.shape[0]

    # Tile selection: large MXU/lane-aligned tiles, minimal grid steps/padding.
    m_align = _sublane_multiple(x.dtype)
    if tm is None:
        tm = _pick_tile(M, 256, m_align)
    if tn is None:
        tn = _pick_tile(N, 512, 128)
    if tk is None:
        tk = _pick_tile(K, 1024, 128)

    Mp, Np, Kp = _round_up(M, tm), _round_up(N, tn), _round_up(K, tk)
    rp = _round_up(r, 8)

    # Hoisted LoRA projection: u = x @ A.T in f32 (tiny: [M, r]).
    u = lax.dot_general(
        x, lora_A,
        dimension_numbers=(((1,), (1,)), ((), ())),
        preferred_element_type=jnp.float32,
    )

    # Pre-transpose the static operands so the kernel matmuls contract
    # (((1,),(0,))) with no per-step transpose.
    weight_t = weight.T            # [K, N]
    lora_B_t = lora_B.T            # [r, N]

    # Zero-pad so every grid dimension divides exactly (padded rows/cols are
    # zero and contribute nothing; result is sliced back at the end).
    x_p = x if (Mp == M and Kp == K) else jnp.pad(x, ((0, Mp - M), (0, Kp - K)))
    wt_p = weight_t if (Kp == K and Np == N) else jnp.pad(
        weight_t, ((0, Kp - K), (0, Np - N)))
    u_p = u if (Mp == M and rp == r) else jnp.pad(
        u, ((0, Mp - M), (0, rp - r)))
    bt_p = lora_B_t if (rp == r and Np == N) else jnp.pad(
        lora_B_t, ((0, rp - r), (0, Np - N)))
    bias_p = bias if Np == N else jnp.pad(bias, ((0, Np - N),))
    bias2d = bias_p.reshape(1, Np)

    grid = (Mp // tm, Np // tn, Kp // tk)

    x_item = jnp.dtype(x.dtype).itemsize
    w_item = jnp.dtype(weight.dtype).itemsize
    b_item = jnp.dtype(lora_B.dtype).itemsize
    # Actual streamed traffic: weight re-read once per i block, x once per j
    # block, u/bias/lora_B are tiny, output written once.
    bytes_accessed = (
        Kp * Np * w_item * (Mp // tm)        # weight stream, refetched per i
        + Mp * Kp * x_item * (Np // tn)      # x stream, refetched per j
        + Mp * rp * 4                        # u (f32), fetched once per i
        + rp * Np * b_item * (Mp // tm)      # lora_B^T, refetched per i
        + Np * jnp.dtype(bias.dtype).itemsize * (Mp // tm)
        + Mp * Np * x_item                   # output
    )
    cost = pl.CostEstimate(
        flops=2 * Mp * Np * Kp + 2 * Mp * rp * Np,
        transcendentals=0,
        bytes_accessed=int(bytes_accessed),
    )

    out = pl.pallas_call(
        _lora_linear_kernel,
        out_shape=jax.ShapeDtypeStruct((Mp, Np), x.dtype),
        grid_spec=pltpu.PrefetchScalarGridSpec(
            num_scalar_prefetch=0,
            grid=grid,
            in_specs=[
                pl.BlockSpec((tm, tk), lambda i, j, k: (i, k)),   # x
                pl.BlockSpec((tk, tn), lambda i, j, k: (k, j)),   # weight^T
                pl.BlockSpec((tm, rp), lambda i, j, k: (i, 0)),   # u = x @ A.T
                pl.BlockSpec((rp, tn), lambda i, j, k: (0, j)),   # lora_B^T
                pl.BlockSpec((1, tn), lambda i, j, k: (0, j)),    # bias
            ],
            out_specs=pl.BlockSpec((tm, tn), lambda i, j, k: (i, j)),
            scratch_shapes=[
                pltpu.VMEM((tm, tn), jnp.float32),   # f32 accumulator
            ],
        ),
        compiler_params=pltpu.CompilerParams(
            dimension_semantics=("parallel", "parallel", "arbitrary"),
            vmem_limit_bytes=48 * 1024 * 1024,   # safe on v7x (64 MiB physical)
        ),
        cost_estimate=cost,
    )(x_p, wt_p, u_p, bt_p, bias2d)

    if Mp != M or Np != N:
        out = out[:M, :N]

    # skip_bias_add=False -> bias already applied, output_bias is None.
    return out, None


def _reference(x, weight, lora_A, lora_B, bias):
    w_eff = weight + lora_B @ lora_A
    return x @ w_eff.T + bias[None, :]


if __name__ == "__main__":
    # Small, deterministic shapes consistent with a Linear layer:
    #   M (tokens) = 16, K (in_features) = 128, N (out_features) = 256, rank = 8
    M, K, N, RANK = 16, 128, 256, 8

    key = jax.random.PRNGKey(0)
    kx, kw, ka, kb, kbias = jax.random.split(key, 5)

    x = jax.random.normal(kx, (M, K), dtype=jnp.float32)
    weight = jax.random.normal(kw, (N, K), dtype=jnp.float32) * 0.05
    lora_A = jax.random.normal(ka, (RANK, K), dtype=jnp.float32) * 0.05
    lora_B = jax.random.normal(kb, (N, RANK), dtype=jnp.float32) * 0.05
    bias = jax.random.normal(kbias, (N,), dtype=jnp.float32) * 0.1

    out, out_bias = column_parallel_linear_with_lora(x, weight, lora_A, lora_B, bias)
    out = jax.block_until_ready(out)

    ref = _reference(x, weight, lora_A, lora_B, bias)
    assert out.shape == (M, N)
    assert out_bias is None
    assert jnp.allclose(out, ref, atol=1e-4, rtol=1e-4), "mismatch vs reference"

    print("KERNEL_OK")
</pallas_src>

<mosaic_0001>
module attributes {stable_mosaic.version = 11 : i64} {
  func.func @_lora_linear_kernel(%arg0: i32, %arg1: i32, %arg2: i32, %arg3: memref<16x128xf32, #tpu.memory_space<vmem>>, %arg4: memref<128x256xf32, #tpu.memory_space<vmem>>, %arg5: memref<16x8xf32, #tpu.memory_space<vmem>>, %arg6: memref<8x256xf32, #tpu.memory_space<vmem>>, %arg7: memref<1x256xf32, #tpu.memory_space<vmem>>, %arg8: memref<16x256xf32, #tpu.memory_space<vmem>>, %arg9: memref<16x256xf32, #tpu.memory_space<vmem>>) attributes {dimension_semantics = [#tpu.dimension_semantics<parallel>, #tpu.dimension_semantics<parallel>, #tpu.dimension_semantics<arbitrary>], iteration_bounds = array<i64: 1, 1, 1>, scalar_prefetch = 0 : i64, scratch_operands = 1 : i64, tpu.core_type = #tpu.core_type<tc>, window_params = [{transform_indices = @transform_0, window_bounds = array<i64: 16, 128>}, {transform_indices = @transform_1, window_bounds = array<i64: 128, 256>}, {transform_indices = @transform_2, window_bounds = array<i64: 16, 8>}, {transform_indices = @transform_3, window_bounds = array<i64: 8, 256>}, {transform_indices = @transform_4, window_bounds = array<i64: 1, 256>}, {transform_indices = @transform_5, window_bounds = array<i64: 16, 256>}]} {
    %c0_i32 = arith.constant 0 : i32
    %0 = arith.cmpi eq, %arg2, %c0_i32 : i32
    %1 = arith.extui %0 : i1 to i32
    %c0_i32_0 = arith.constant 0 : i32
    %2 = arith.cmpi ne, %1, %c0_i32_0 : i32
    scf.if %2 {
      %cst_10 = arith.constant 0.000000e+00 : f32
      %12 = vector.broadcast %cst_10 : f32 to vector<16x256xf32>
      %c0_11 = arith.constant 0 : index
      %c0_12 = arith.constant 0 : index
      %13 = vector.load %arg9[%c0_11, %c0_12] : memref<16x256xf32, #tpu.memory_space<vmem>>, vector<16x256xf32>
      tpu.vector_store %arg9[%c0_11, %c0_12], %12 {strides = array<i32>} : memref<16x256xf32, #tpu.memory_space<vmem>>, vector<16x256xf32>,
    } else {
    }
    %c0 = arith.constant 0 : index
    %c0_1 = arith.constant 0 : index
    %3 = vector.load %arg9[%c0, %c0_1] : memref<16x256xf32, #tpu.memory_space<vmem>>, vector<16x256xf32>
    %c0_2 = arith.constant 0 : index
    %c0_3 = arith.constant 0 : index
    %4 = vector.load %arg3[%c0_2, %c0_3] : memref<16x128xf32, #tpu.memory_space<vmem>>, vector<16x128xf32>
    %c0_4 = arith.constant 0 : index
    %c0_5 = arith.constant 0 : index
    %5 = vector.load %arg4[%c0_4, %c0_5] : memref<128x256xf32, #tpu.memory_space<vmem>>, vector<128x256xf32>
    %cst = arith.constant dense<0.000000e+00> : vector<16x256xf32>
    %6 = tpu.matmul %4, %5, %cst {dimension_numbers = #tpu.dot_dimension_numbers<[1], [0], [0], [1], [0, 0, 1, 1], [], []>} : vector<16x128xf32>, vector<128x256xf32>, vector<16x256xf32> -> vector<16x256xf32>
    %7 = arith.addf %3, %6 : vector<16x256xf32>
    %c0_6 = arith.constant 0 : index
    %c0_7 = arith.constant 0 : index
    %8 = vector.load %arg9[%c0_6, %c0_7] : memref<16x256xf32, #tpu.memory_space<vmem>>, vector<16x256xf32>
    tpu.vector_store %arg9[%c0_6, %c0_7], %7 {strides = array<i32>} : memref<16x256xf32, #tpu.memory_space<vmem>>, vector<16x256xf32>,
    %c0_i32_8 = arith.constant 0 : i32
    %9 = arith.cmpi eq, %arg2, %c0_i32_8 : i32
    %10 = arith.extui %9 : i1 to i32
    %c0_i32_9 = arith.constant 0 : i32
    %11 = arith.cmpi ne, %10, %c0_i32_9 : i32
    scf.if %11 {
      %c0_10 = arith.constant 0 : index
      %c0_11 = arith.constant 0 : index
      %12 = vector.load %arg5[%c0_10, %c0_11] : memref<16x8xf32, #tpu.memory_space<vmem>>, vector<16x8xf32>
      %c0_12 = arith.constant 0 : index
      %c0_13 = arith.constant 0 : index
      %13 = vector.load %arg6[%c0_12, %c0_13] : memref<8x256xf32, #tpu.memory_space<vmem>>, vector<8x256xf32>
      %cst_14 = arith.constant dense<0.000000e+00> : vector<16x256xf32>
      %14 = tpu.matmul %12, %13, %cst_14 {dimension_numbers = #tpu.dot_dimension_numbers<[1], [0], [0], [1], [0, 0, 1, 1], [], []>} : vector<16x8xf32>, vector<8x256xf32>, vector<16x256xf32> -> vector<16x256xf32>
      %c0_15 = arith.constant 0 : index
      %c0_16 = arith.constant 0 : index
      %15 = vector.load %arg9[%c0_15, %c0_16] : memref<16x256xf32, #tpu.memory_space<vmem>>, vector<16x256xf32>
      %16 = arith.addf %15, %14 : vector<16x256xf32>
      %c0_17 = arith.constant 0 : index
      %c0_18 = arith.constant 0 : index
      %17 = vector.load %arg7[%c0_17, %c0_18] : memref<1x256xf32, #tpu.memory_space<vmem>>, vector<1x256xf32>
      %18 = vector.broadcast %17 : vector<1x256xf32> to vector<16x256xf32>
      %19 = arith.addf %16, %18 : vector<16x256xf32>
      %c0_19 = arith.constant 0 : index
      %c0_20 = arith.constant 0 : index
      %20 = vector.load %arg8[%c0_19, %c0_20] : memref<16x256xf32, #tpu.memory_space<vmem>>, vector<16x256xf32>
      tpu.vector_store %arg8[%c0_19, %c0_20], %19 {strides = array<i32>} : memref<16x256xf32, #tpu.memory_space<vmem>>, vector<16x256xf32>,
    } else {
    }
    return
  }
  func.func @transform_0(%arg0: i32, %arg1: i32, %arg2: i32) -> (i32, i32) {
    %c0_i32 = arith.constant 0 : i32
    return %arg0, %arg2 : i32, i32
  }
  func.func @transform_1(%arg0: i32, %arg1: i32, %arg2: i32) -> (i32, i32) {
    %c0_i32 = arith.constant 0 : i32
    return %arg2, %arg1 : i32, i32
  }
  func.func @transform_2(%arg0: i32, %arg1: i32, %arg2: i32) -> (i32, i32) {
    %c0_i32 = arith.constant 0 : i32
    %c0_i32_0 = arith.constant 0 : i32
    return %arg0, %c0_i32 : i32, i32
  }
  func.func @transform_3(%arg0: i32, %arg1: i32, %arg2: i32) -> (i32, i32) {
    %c0_i32 = arith.constant 0 : i32
    %c0_i32_0 = arith.constant 0 : i32
    return %c0_i32, %arg1 : i32, i32
  }
  func.func @transform_4(%arg0: i32, %arg1: i32, %arg2: i32) -> (i32, i32) {
    %c0_i32 = arith.constant 0 : i32
    %c0_i32_0 = arith.constant 0 : i32
    return %c0_i32, %arg1 : i32, i32
  }
  func.func @transform_5(%arg0: i32, %arg1: i32, %arg2: i32) -> (i32, i32) {
    %c0_i32 = arith.constant 0 : i32
    return %arg0, %arg1 : i32, i32
  }
}

</mosaic_0001>

<llo_original>
// kernel: column_parallel_linear_with_lora.1
$region0: #{column_parallel_linear_with_lora.1}
  #allocation0 [shape = 'u32[]', space=smem, size = 0x4, offset = 0x4, fixed_abs, tag = 'smem constant byte address 0x4 - core index']
  #allocation1 [shape = 'u32[144,128]{1,0:T(1,128)}', space=vmem, size = 0x12000, scoped, tag = 'internal scratch']
  #allocation2 [shape = 'f32[16,256]{1,0:T(8,128)}', space=vmem, size = 0x4000, scoped, tag = 'scratch operand']
  %s0 = inlined_call_operand.vmem [shape: f32[16,128], index: 0, kind: input, shape index: {}]
  %s1 = inlined_call_operand.vmem [shape: f32[128,256], index: 1, kind: input, shape index: {}]
  %s2 = inlined_call_operand.vmem [shape: f32[16,8], index: 2, kind: input, shape index: {}]
  %s3 = inlined_call_operand.vmem [shape: f32[8,256], index: 3, kind: input, shape index: {}]
  %s4 = inlined_call_operand.vmem [shape: f32[1,256], index: 4, kind: input, shape index: {}]
  %s5 = inlined_call_operand.hbm [shape: f32[16,256], index: 5, kind: output, shape index: {}]
  %s6 = sld [smem:[#allocation0]]
  $region38: #{column_parallel_linear_with_lora.1} parent=0
    _
  %s8 = ssub.s32 1, %s6
  %s9 = scalar_select 0, %s8, %s6
  $region1: #{column_parallel_linear_with_lora.1} parent=0
    #allocation3 [shape = 'u8[16384]{0}', space=vmem, size = 0x4000, scoped, tag = 'output window, operand 0, single buffered']
    #allocation4 [shape = 's32[1]{0}', space=sflag, size = 0x4, scoped, tag = 'scoped memory for column_parallel_linear_with_lora.1']
    %10 = vsyncpa [#allocation4], 0
    // Predicated region
    $region2: #{column_parallel_linear_with_lora.1} parent=1 // pred_check
      _
    $region3: #{column_parallel_linear_with_lora.1} parent=1 // pred_check_branch
      %12 = sbr.rel (0) target = $region5
    $region4: #{column_parallel_linear_with_lora.1} parent=1 // pred_region
      _
    $region5: #{column_parallel_linear_with_lora.1} parent=1 // pred_fallthru
      _
    // Predicated region
    $region6: #{column_parallel_linear_with_lora.1} parent=1 // pred_check
      _
    $region7: #{column_parallel_linear_with_lora.1} parent=1 // pred_check_branch
      %14 = sbr.rel (0) target = $region9
    $region8: #{column_parallel_linear_with_lora.1} parent=1 // pred_region
      _
    $region9: #{column_parallel_linear_with_lora.1} parent=1 // pred_fallthru
      _
    // Predicated region
    $region10: #{column_parallel_linear_with_lora.1} parent=1 // pred_check
      _
    $region11: #{column_parallel_linear_with_lora.1} parent=1 // pred_check_branch
      %16 = sbr.rel (0) target = $region13
    $region12: #{column_parallel_linear_with_lora.1} parent=1 // pred_region
      _
    $region13: #{column_parallel_linear_with_lora.1} parent=1 // pred_fallthru
      _
    // Predicated region
    $region14: #{column_parallel_linear_with_lora.1} parent=1 // pred_check
      _
    $region15: #{column_parallel_linear_with_lora.1} parent=1 // pred_check_branch
      %18 = sbr.rel (0) target = $region17
    $region16: #{column_parallel_linear_with_lora.1} parent=1 // pred_region
      _
    $region17: #{column_parallel_linear_with_lora.1} parent=1 // pred_fallthru
      _
    // Predicated region
    $region18: #{column_parallel_linear_with_lora.1} parent=1 // pred_check
      _
    $region19: #{column_parallel_linear_with_lora.1} parent=1 // pred_check_branch
      %20 = sbr.rel (0) target = $region21
    $region20: #{column_parallel_linear_with_lora.1} parent=1 // pred_region
      _
    $region21: #{column_parallel_linear_with_lora.1} parent=1 // pred_fallthru
      _
    %p21 = scmp.eq.s32.totalorder 0, 0
    // Predicated region
    $region22: #{column_parallel_linear_with_lora.1} parent=1 // pred_check
      %p22 = pneg %p21
    $region23: #{column_parallel_linear_with_lora.1} parent=1 // pred_check_branch
      %24 = sbr.rel (%p22) target = $region25
    $region24: #{column_parallel_linear_with_lora.1} parent=1 // pred_region
      %25 = vst [vmem:[#allocation2] sm:$0xff] 0.0
      %26 = vst [vmem:[#allocation2 + $0x8] sm:$0xff] 0.0
      %27 = vst [vmem:[#allocation2 + $0x10] sm:$0xff] 0.0
      %28 = vst [vmem:[#allocation2 + $0x18] sm:$0xff] 0.0
    $region25: #{column_parallel_linear_with_lora.1} parent=1 // pred_fallthru
      _
    %v29 = vld [vmem:[#allocation2] sm:$0xff]
    %v30 = vld [vmem:[#allocation2 + $0x8] sm:$0xff]
    %v31 = vld [vmem:[#allocation2 + $0x10] sm:$0xff]
    %v32 = vld [vmem:[#allocation2 + $0x18] sm:$0xff]
    %v33 = vld [vmem:[%s0] sm:$0xff]
    %v34 = vld [vmem:[%s0 + $0x8] sm:$0xff]
    %v35 = vld [vmem:[%s1] sm:$0xff]
    %v36 = vld [vmem:[%s1 + $0x8] sm:$0xff]
    %v37 = vld [vmem:[%s1 + $0x10] sm:$0xff]
    %v38 = vld [vmem:[%s1 + $0x18] sm:$0xff]
    %v39 = vld [vmem:[%s1 + $0x20] sm:$0xff]
    %v40 = vld [vmem:[%s1 + $0x28] sm:$0xff]
    %v41 = vld [vmem:[%s1 + $0x30] sm:$0xff]
    %v42 = vld [vmem:[%s1 + $0x38] sm:$0xff]
    %v43 = vld [vmem:[%s1 + $0x40] sm:$0xff]
    %v44 = vld [vmem:[%s1 + $0x48] sm:$0xff]
    %v45 = vld [vmem:[%s1 + $0x50] sm:$0xff]
    %v46 = vld [vmem:[%s1 + $0x58] sm:$0xff]
    %v47 = vld [vmem:[%s1 + $0x60] sm:$0xff]
    %v48 = vld [vmem:[%s1 + $0x68] sm:$0xff]
    %v49 = vld [vmem:[%s1 + $0x70] sm:$0xff]
    %v50 = vld [vmem:[%s1 + $0x78] sm:$0xff]
    %v51 = vld [vmem:[%s1 + $0x80] sm:$0xff]
    %v52 = vld [vmem:[%s1 + $0x88] sm:$0xff]
    %v53 = vld [vmem:[%s1 + $0x90] sm:$0xff]
    %v54 = vld [vmem:[%s1 + $0x98] sm:$0xff]
    %v55 = vld [vmem:[%s1 + $0xa0] sm:$0xff]
    %v56 = vld [vmem:[%s1 + $0xa8] sm:$0xff]
    %v57 = vld [vmem:[%s1 + $0xb0] sm:$0xff]
    %v58 = vld [vmem:[%s1 + $0xb8] sm:$0xff]
    %v59 = vld [vmem:[%s1 + $0xc0] sm:$0xff]
    %v60 = vld [vmem:[%s1 + $0xc8] sm:$0xff]
    %v61 = vld [vmem:[%s1 + $0xd0] sm:$0xff]
    %v62 = vld [vmem:[%s1 + $0xd8] sm:$0xff]
    %v63 = vld [vmem:[%s1 + $0xe0] sm:$0xff]
    %v64 = vld [vmem:[%s1 + $0xe8] sm:$0xff]
    %v65 = vld [vmem:[%s1 + $0xf0] sm:$0xff]
    %v66 = vld [vmem:[%s1 + $0xf8] sm:$0xff]
    %67 = vmatprep.subr.mxu0 %v66
    %68 = vmatpush1.msra.mxu0 %v65
    %69 = vmatprep.subr.mxu0 %v64
    %70 = vmatpush1.msra.mxu0 %v63
    %71 = vmatprep.subr.mxu0 %v62
    %72 = vmatpush1.msra.mxu0 %v61
    %73 = vmatprep.subr.mxu0 %v60
    %74 = vmatpush1.msra.mxu0 %v59
    %75 = vmatprep.subr.mxu0 %v58
    %76 = vmatpush1.msra.mxu0 %v57
    %77 = vmatprep.subr.mxu0 %v56
    %78 = vmatpush1.msra.mxu0 %v55
    %79 = vmatprep.subr.mxu0 %v54
    %80 = vmatpush1.msra.mxu0 %v53
    %81 = vmatprep.subr.mxu0 %v52
    %82 = vmatpush1.msra.mxu0 %v51
    %83 = vmatprep.subr.mxu0 %v50
    %84 = vmatpush1.msra.mxu0 %v49
    %85 = vmatprep.subr.mxu0 %v48
    %86 = vmatpush1.msra.mxu0 %v47
    %87 = vmatprep.subr.mxu0 %v46
    %88 = vmatpush1.msra.mxu0 %v45
    %89 = vmatprep.subr.mxu0 %v44
    %90 = vmatpush1.msra.mxu0 %v43
    %91 = vmatprep.subr.mxu0 %v42
    %92 = vmatpush1.msra.mxu0 %v41
    %93 = vmatprep.subr.mxu0 %v40
    %94 = vmatpush1.msra.mxu0 %v39
    %95 = vmatprep.subr.mxu0 %v38
    %96 = vmatpush1.msra.mxu0 %v37
    %97 = vmatprep.subr.mxu0 %v36
    %98 = vmatpush1.msra.mxu0 %v35
    %99 = vmatprep.subr.mxu0 0.0
    %100 = vmatpush2.msra.mxu0 0.0
    %101 = vmatprep.subr.mxu0 0.0
    %102 = vmatpush2.msra.mxu0 0.0
    %103 = vmatprep.subr.mxu0 0.0
    %104 = vmatpush2.msra.mxu0 0.0
    %105 = vmatprep.subr.mxu0 0.0
    %106 = vmatpush2.msra.mxu0 0.0
    %107 = vmatprep.subr.mxu0 0.0
    %108 = vmatpush2.msra.mxu0 0.0
    %109 = vmatprep.subr.mxu0 0.0
    %110 = vmatpush2.msra.mxu0 0.0
    %111 = vmatprep.subr.mxu0 0.0
    %112 = vmatpush2.msra.mxu0 0.0
    %113 = vmatprep.subr.mxu0 0.0
    %114 = vmatpush2.msra.mxu0 0.0
    %115 = vmatprep.subr.mxu0 0.0
    %116 = vmatpush2.msra.mxu0 0.0
    %117 = vmatprep.subr.mxu0 0.0
    %118 = vmatpush2.msra.mxu0 0.0
    %119 = vmatprep.subr.mxu0 0.0
    %120 = vmatpush2.msra.mxu0 0.0
    %121 = vmatprep.subr.mxu0 0.0
    %122 = vmatpush2.msra.mxu0 0.0
    %123 = vmatprep.subr.mxu0 0.0
    %124 = vmatpush2.msra.mxu0 0.0
    %125 = vmatprep.subr.mxu0 0.0
    %126 = vmatpush2.msra.mxu0 0.0
    %127 = vmatprep.subr.mxu0 0.0
    %128 = vmatpush2.msra.mxu0 0.0
    %129 = vmatprep.subr.mxu0 0.0
    %130 = vmatpush2.msra.mxu0 0.0
    %131 = vmatprep.mubr.f32.mxu0 0.0
    %132 = vmatmul.mubr.f32.gmra.mxu0 %v33
    %v133 = vpop.f32.mrf.mxu0
    %v134 = vadd.f32 0.0, %v133
    %v135 = vpop.f32.mrf.mxu0
    %v136 = vadd.f32 0.0, %v135
    %137 = vmatprep.mubr.f32.mxu0 0.0
    %138 = vmatmul.mubr.f32.gmra.mxu0 %v34
    %v139 = vpop.f32.mrf.mxu0
    %v140 = vadd.f32 0.0, %v139
    %v141 = vpop.f32.mrf.mxu0
    %v142 = vadd.f32 0.0, %v141
    %143 = vdwg.mxu0
    %v144 = vadd.f32 %v29, %v134
    %v145 = vadd.f32 %v30, %v136
    %v146 = vadd.f32 %v31, %v140
    %v147 = vadd.f32 %v32, %v142
    %148 = vst [vmem:[#allocation2] sm:$0xff] %v144
    %149 = vst [vmem:[#allocation2 + $0x8] sm:$0xff] %v145
    %150 = vst [vmem:[#allocation2 + $0x10] sm:$0xff] %v146
    %151 = vst [vmem:[#allocation2 + $0x18] sm:$0xff] %v147
    // Predicated region
    $region26: #{column_parallel_linear_with_lora.1} parent=1 // pred_check
      %p152 = pneg %p21
    $region27: #{column_parallel_linear_with_lora.1} parent=1 // pred_check_branch
      %154 = sbr.rel (%p152) target = $region29
    $region28: #{column_parallel_linear_with_lora.1} parent=1 // pred_region
      %v155 = vld [vmem:[%s2] sm:$0xff]
      %v156 = vld [vmem:[%s2 + $0x8] sm:$0xff]
      %v157 = vld [vmem:[%s3] sm:$0xff]
      %v158 = vld [vmem:[%s3 + $0x8] sm:$0xff]
      %vm159 = vcmask 64512
      %v161 = vsel %vm159, %v155, 0
      %v164 = vsel %vm159, %v156, 0
      %166 = vmatprep.subr.mxu0 0.0
      %167 = vmatpush1.msra.mxu0 0.0
      %168 = vmatprep.subr.mxu0 0.0
      %169 = vmatpush1.msra.mxu0 0.0
      %170 = vmatprep.subr.mxu0 0.0
      %171 = vmatpush1.msra.mxu0 0.0
      %172 = vmatprep.subr.mxu0 0.0
      %173 = vmatpush1.msra.mxu0 0.0
      %174 = vmatprep.subr.mxu0 0.0
      %175 = vmatpush1.msra.mxu0 0.0
      %176 = vmatprep.subr.mxu0 0.0
      %177 = vmatpush1.msra.mxu0 0.0
      %178 = vmatprep.subr.mxu0 0.0
      %179 = vmatpush1.msra.mxu0 0.0
      %180 = vmatprep.subr.mxu0 0.0
      %181 = vmatpush1.msra.mxu0 0.0
      %182 = vmatprep.subr.mxu0 0.0
      %183 = vmatpush1.msra.mxu0 0.0
      %184 = vmatprep.subr.mxu0 0.0
      %185 = vmatpush1.msra.mxu0 0.0
      %186 = vmatprep.subr.mxu0 0.0
      %187 = vmatpush1.msra.mxu0 0.0
      %188 = vmatprep.subr.mxu0 0.0
      %189 = vmatpush1.msra.mxu0 0.0
      %190 = vmatprep.subr.mxu0 0.0
      %191 = vmatpush1.msra.mxu0 0.0
      %192 = vmatprep.subr.mxu0 0.0
      %193 = vmatpush1.msra.mxu0 0.0
      %194 = vmatprep.subr.mxu0 0.0
      %195 = vmatpush1.msra.mxu0 0.0
      %196 = vmatprep.subr.mxu0 %v158
      %197 = vmatpush1.msra.mxu0 %v157
      %198 = vmatprep.subr.mxu0 0.0
      %199 = vmatpush2.msra.mxu0 0.0
      %200 = vmatprep.subr.mxu0 0.0
      %201 = vmatpush2.msra.mxu0 0.0
      %202 = vmatprep.subr.mxu0 0.0
      %203 = vmatpush2.msra.mxu0 0.0
      %204 = vmatprep.subr.mxu0 0.0
      %205 = vmatpush2.msra.mxu0 0.0
      %206 = vmatprep.subr.mxu0 0.0
      %207 = vmatpush2.msra.mxu0 0.0
      %208 = vmatprep.subr.mxu0 0.0
      %209 = vmatpush2.msra.mxu0 0.0
      %210 = vmatprep.subr.mxu0 0.0
      %211 = vmatpush2.msra.mxu0 0.0
      %212 = vmatprep.subr.mxu0 0.0
      %213 = vmatpush2.msra.mxu0 0.0
      %214 = vmatprep.subr.mxu0 0.0
      %215 = vmatpush2.msra.mxu0 0.0
      %216 = vmatprep.subr.mxu0 0.0
      %217 = vmatpush2.msra.mxu0 0.0
      %218 = vmatprep.subr.mxu0 0.0
      %219 = vmatpush2.msra.mxu0 0.0
      %220 = vmatprep.subr.mxu0 0.0
      %221 = vmatpush2.msra.mxu0 0.0
      %222 = vmatprep.subr.mxu0 0.0
      %223 = vmatpush2.msra.mxu0 0.0
      %224 = vmatprep.subr.mxu0 0.0
      %225 = vmatpush2.msra.mxu0 0.0
      %226 = vmatprep.subr.mxu0 0.0
      %227 = vmatpush2.msra.mxu0 0.0
      %228 = vmatprep.subr.mxu0 0.0
      %229 = vmatpush2.msra.mxu0 0.0
      %230 = vmatprep.mubr.f32.mxu0 0.0
      %231 = vmatmul.mubr.f32.gmra.mxu0 %v161
      %v232 = vpop.f32.mrf.mxu0
      %v233 = vadd.f32 0.0, %v232
      %v234 = vpop.f32.mrf.mxu0
      %v235 = vadd.f32 0.0, %v234
      %236 = vmatprep.mubr.f32.mxu0 0.0
      %237 = vmatmul.mubr.f32.gmra.mxu0 %v164
      %v238 = vpop.f32.mrf.mxu0
      %v239 = vadd.f32 0.0, %v238
      %v240 = vpop.f32.mrf.mxu0
      %v241 = vadd.f32 0.0, %v240
      %242 = vdwg.mxu0
      %v243 = vld [vmem:[#allocation2] sm:$0xff]
      %v244 = vld [vmem:[#allocation2 + $0x8] sm:$0xff]
      %v245 = vld [vmem:[#allocation2 + $0x10] sm:$0xff]
      %v246 = vld [vmem:[#allocation2 + $0x18] sm:$0xff]
      %v247 = vadd.f32 %v243, %v233
      %v248 = vadd.f32 %v244, %v235
      %v249 = vadd.f32 %v245, %v239
      %v250 = vadd.f32 %v246, %v241
      %v251 = vld [vmem:[%s4] sm:$0x3]
      %v253 = vlaneseq
      %v254 = vshrl.u32 %v253, 7
      %v255 = vsub.s32 0, %v254
      %v256 = vrot.slane %v251, %v255
      %v257 = vlaneseq
      %v258 = vshrl.u32 %v257, 7
      %v259 = vsub.s32 1, %v258
      %v260 = vrot.slane %v251, %v259
      %v263 = vadd.f32 %v247, %v256
      %v264 = vadd.f32 %v248, %v260
      %v265 = vadd.f32 %v249, %v256
      %v266 = vadd.f32 %v250, %v260
      %267 = vst [vmem:[#allocation3] sm:$0xff] %v263
      %268 = vst [vmem:[#allocation3 + $0x8] sm:$0xff] %v264
      %269 = vst [vmem:[#allocation3 + $0x10] sm:$0xff] %v265
      %270 = vst [vmem:[#allocation3 + $0x18] sm:$0xff] %v266
    $region29: #{column_parallel_linear_with_lora.1} parent=1 // pred_fallthru
      _
    // Predicated region
    $region30: #{column_parallel_linear_with_lora.1} parent=1 // pred_check
      _
    $region31: #{column_parallel_linear_with_lora.1} parent=1 // pred_check_branch
      %272 = sbr.rel (0) target = $region33
    $region32: #{column_parallel_linear_with_lora.1} parent=1 // pred_region
      %s274 = ssub.s32 512, 512
      %275 = vsyncadd [#allocation4], %s274
      %s276 = sshll.u32 [#allocation3], 4
      %s277 = int_to_ptr.vmem [resolvable:$true] %s276
      %282 = dma.vmem_to_hbm [thread:$0]  %s277, 512, %s5, [#allocation4], 256, 256, 16
    $region33: #{column_parallel_linear_with_lora.1} parent=1 // pred_fallthru
      _
    // Predicated region
    $region34: #{column_parallel_linear_with_lora.1} parent=1 // pred_check
      _
    $region35: #{column_parallel_linear_with_lora.1} parent=1 // pred_check_branch
      %284 = sbr.rel (0) target = $region37
    $region36: #{column_parallel_linear_with_lora.1} parent=1 // pred_region
      %285 = dma.done [#allocation4], 512
    $region37: #{column_parallel_linear_with_lora.1} parent=1 // pred_fallthru
      _
    %286 = vsyncpa [#allocation4], 1

</llo_original>
